<compile_context>
chip_gen: v7x
topology: tpu7x:2x2x1
jax: 0.10.0
libtpu: 0.0.40
codegen_flags: <defaults>
</compile_context>

<pallas_src>
import math
import numpy as np
import jax
import jax.numpy as jnp
from jax.experimental import pallas as pl
from jax.experimental.pallas import tpu as pltpu

C_IN = 4                  # input channels (4 QoS features)
C_OUT = 180               # output channels of both conv layers
GROUPS = 4
CG_IN1 = C_IN // GROUPS   # 1 input channel per group (layer 1)
CG = C_OUT // GROUPS      # 45 channels per group (layer 2)
K = 5                     # kernel size

# TPU-aligned padded dims (channels live on the lane axis)
CP = 256                  # channel axis padded to two lane tiles
GP = 8                    # input-feature axis padded
RP = 8                    # sublane padding of the row axis


def group1dcnn_kernel(xp_ref, w1_ref, b1_ref, w2_ref, b2_ref, out_ref):
    # ---- layer 1: grouped conv with L=1 -> single-tap matmul (channels on lanes) ----
    y1 = jnp.maximum(
        jnp.dot(xp_ref[...], w1_ref[...], preferred_element_type=jnp.float32) + b1_ref[...],
        0.0)                                                                   # (RP, CP)
    # ---- layer 2: block-diagonal grouped conv (group mask pre-folded into w2) ----
    y2 = jnp.dot(y1, w2_ref[...], preferred_element_type=jnp.float32) + b2_ref[...]
    out_ref[...] = jnp.maximum(y2, 0.0)                                         # (RP, CP)


def pack_params(w1, b1, w2, b2):
    """One-time packing of the (fixed) conv parameters into TPU-aligned tiles."""
    group_of = jnp.arange(C_OUT) // CG                          # group of each output channel
    # layer-1 effective weights: W1eff[g, o] = w1[o, 0, K-1] iff group(o) == g
    w1eff = jnp.zeros((GP, CP), jnp.float32).at[group_of, jnp.arange(C_OUT)].set(w1[:, 0, K - 1])
    b1p = jnp.zeros((RP, CP), jnp.float32).at[0, :C_OUT].set(b1)
    # layer-2 block-diagonal weights: W2blk[c, o] = w2[o, j, K-1] with c = group(o)*CG + j
    in_idx = group_of[:, None] * CG + jnp.arange(CG)[None, :]                # (180, 45)
    out_idx = jnp.broadcast_to(jnp.arange(C_OUT)[:, None], (C_OUT, CG))      # (180, 45)
    w2blk = jnp.zeros((CP, CP), jnp.float32).at[in_idx, out_idx].set(w2[:, :, K - 1])
    b2p = jnp.zeros((RP, CP), jnp.float32).at[0, :C_OUT].set(b2)
    return w1eff, b1p, w2blk, b2p


@jax.jit
def group1dcnn_forward(x, packed):
    w1eff, b1p, w2blk, b2p = packed
    # per-call packing: only the 4-element input (row 0 of an (8,8) tile)
    xp = jnp.zeros((RP, GP), jnp.float32).at[0, :C_IN].set(x)
    out = pl.pallas_call(
        group1dcnn_kernel,
        out_shape=jax.ShapeDtypeStruct((RP, CP), jnp.float32),
        in_specs=[pl.BlockSpec(memory_space=pltpu.MemorySpace.VMEM)] * 5,
        out_specs=pl.BlockSpec(memory_space=pltpu.MemorySpace.VMEM),
    )(xp, w1eff, b1p, w2blk, b2p)
    # PyTorch forward returns shape (1, 180) after permute + squeeze
    return out[0, :C_OUT].reshape(1, C_OUT)


def ref_forward(x, w1, b1, w2, b2):
    """Plain-JAX reference reproducing the PyTorch forward exactly."""
    xin = x.reshape(1, C_IN, 1)                                   # (1, 4, 1) NCL
    xpad = jnp.pad(xin, ((0, 0), (0, 0), (K - 1, 0)))             # ZeroPad1d((4,0))
    gof = jnp.arange(C_OUT) // CG
    y1 = jnp.einsum('ok,ok->o', w1[:, 0, :], xpad[0, gof, :]) + b1
    y1 = jnp.maximum(y1, 0.0)
    y1pad = jnp.pad(y1.reshape(1, C_OUT, 1), ((0, 0), (0, 0), (K - 1, 0)))
    in_idx = gof[:, None] * CG + jnp.arange(CG)[None, :]          # (180, 45) grouped input channels
    y2 = jnp.einsum('ock,ock->o', w2, y1pad[0, in_idx, :]) + b2
    y2 = jnp.maximum(y2, 0.0)
    return y2.reshape(1, C_OUT)


if __name__ == "__main__":
    key = jax.random.PRNGKey(0)
    kx, k1, k2, k3, k4 = jax.random.split(key, 5)

    # module input implied by forward(): a 1-D vector of 4 features
    x = jax.random.normal(kx, (C_IN,), jnp.float32)

    # deterministic parameter init (PyTorch Conv1d-style uniform bounds)
    bound1 = 1.0 / math.sqrt(CG_IN1 * K)
    w1 = jax.random.uniform(k1, (C_OUT, CG_IN1, K), jnp.float32, -bound1, bound1)
    b1 = jax.random.uniform(k2, (C_OUT,), jnp.float32, -bound1, bound1)
    bound2 = 1.0 / math.sqrt(CG * K)
    w2 = jax.random.uniform(k3, (C_OUT, CG, K), jnp.float32, -bound2, bound2)
    b2 = jax.random.uniform(k4, (C_OUT,), jnp.float32, -bound2, bound2)

    # pack the constant parameters ONCE, outside the per-call path
    packed = jax.block_until_ready(pack_params(w1, b1, w2, b2))

    out = jax.block_until_ready(group1dcnn_forward(x, packed))
    ref = jax.block_until_ready(ref_forward(x, w1, b1, w2, b2))

    assert out.shape == (1, C_OUT)
    np.testing.assert_allclose(np.asarray(out), np.asarray(ref), rtol=2e-3, atol=2e-3)
    print("KERNEL_OK")
</pallas_src>

<mosaic_0001>
module attributes {stable_mosaic.version = 11 : i64} {
  func.func @group1dcnn_kernel(%arg0: memref<8x8xf32, #tpu.memory_space<vmem>>, %arg1: memref<8x256xf32, #tpu.memory_space<vmem>>, %arg2: memref<8x256xf32, #tpu.memory_space<vmem>>, %arg3: memref<256x256xf32, #tpu.memory_space<vmem>>, %arg4: memref<8x256xf32, #tpu.memory_space<vmem>>, %arg5: memref<8x256xf32, #tpu.memory_space<vmem>>) attributes {dimension_semantics = [], scalar_prefetch = 0 : i64, scratch_operands = 0 : i64, tpu.core_type = #tpu.core_type<tc>} {
    %c0 = arith.constant 0 : index
    %c0_0 = arith.constant 0 : index
    %0 = vector.load %arg0[%c0, %c0_0] : memref<8x8xf32, #tpu.memory_space<vmem>>, vector<8x8xf32>
    %c0_1 = arith.constant 0 : index
    %c0_2 = arith.constant 0 : index
    %1 = vector.load %arg1[%c0_1, %c0_2] : memref<8x256xf32, #tpu.memory_space<vmem>>, vector<8x256xf32>
    %cst = arith.constant dense<0.000000e+00> : vector<8x256xf32>
    %2 = tpu.matmul %0, %1, %cst {dimension_numbers = #tpu.dot_dimension_numbers<[1], [0], [0], [1], [0, 0, 1, 1], [], []>} : vector<8x8xf32>, vector<8x256xf32>, vector<8x256xf32> -> vector<8x256xf32>
    %c0_3 = arith.constant 0 : index
    %c0_4 = arith.constant 0 : index
    %3 = vector.load %arg2[%c0_3, %c0_4] : memref<8x256xf32, #tpu.memory_space<vmem>>, vector<8x256xf32>
    %4 = arith.addf %2, %3 : vector<8x256xf32>
    %cst_5 = arith.constant 0.000000e+00 : f32
    %5 = vector.broadcast %cst_5 : f32 to vector<8x256xf32>
    %6 = arith.maximumf %4, %5 : vector<8x256xf32>
    %c0_6 = arith.constant 0 : index
    %c0_7 = arith.constant 0 : index
    %7 = vector.load %arg3[%c0_6, %c0_7] : memref<256x256xf32, #tpu.memory_space<vmem>>, vector<256x256xf32>
    %cst_8 = arith.constant dense<0.000000e+00> : vector<8x256xf32>
    %8 = tpu.matmul %6, %7, %cst_8 {dimension_numbers = #tpu.dot_dimension_numbers<[1], [0], [0], [1], [0, 0, 1, 1], [], []>} : vector<8x256xf32>, vector<256x256xf32>, vector<8x256xf32> -> vector<8x256xf32>
    %c0_9 = arith.constant 0 : index
    %c0_10 = arith.constant 0 : index
    %9 = vector.load %arg4[%c0_9, %c0_10] : memref<8x256xf32, #tpu.memory_space<vmem>>, vector<8x256xf32>
    %10 = arith.addf %8, %9 : vector<8x256xf32>
    %cst_11 = arith.constant 0.000000e+00 : f32
    %11 = vector.broadcast %cst_11 : f32 to vector<8x256xf32>
    %12 = arith.maximumf %10, %11 : vector<8x256xf32>
    %c0_12 = arith.constant 0 : index
    %c0_13 = arith.constant 0 : index
    %13 = vector.load %arg5[%c0_12, %c0_13] : memref<8x256xf32, #tpu.memory_space<vmem>>, vector<8x256xf32>
    tpu.vector_store %arg5[%c0_12, %c0_13], %12 {strides = array<i32>} : memref<8x256xf32, #tpu.memory_space<vmem>>, vector<8x256xf32>,
    return
  }
}

</mosaic_0001>

<llo_original>
// kernel: group1dcnn_forward.1
$region0: #{group1dcnn_forward.1}
  #allocation0 [shape = 'u32[]', space=smem, size = 0x4, offset = 0x4, fixed_abs, tag = 'smem constant byte address 0x4 - core index']
  #allocation1 [shape = 'u32[144,128]{1,0:T(1,128)}', space=vmem, size = 0x12000, scoped, tag = 'internal scratch']
  %s0 = inlined_call_operand.vmem [shape: f32[8,8], index: 0, kind: input, shape index: {}]
  %s1 = inlined_call_operand.vmem [shape: f32[8,256], index: 1, kind: input, shape index: {}]
  %s2 = inlined_call_operand.hbm [shape: f32[8,256], index: 2, kind: input, shape index: {}]
  %s3 = inlined_call_operand.hbm [shape: f32[256,256], index: 3, kind: input, shape index: {}]
  %s4 = inlined_call_operand.hbm [shape: f32[8,256], index: 4, kind: input, shape index: {}]
  %s5 = inlined_call_operand.vmem [shape: f32[8,256], index: 5, kind: output, shape index: {}]
  %s6 = sld [smem:[#allocation0]]
  $region42: #{group1dcnn_forward.1} parent=0
    _
  %s8 = ssub.s32 1, %s6
  %s9 = scalar_select 0, %s8, %s6
  $region1: #{group1dcnn_forward.1} parent=0
    #allocation2 [shape = 'u8[8192]{0}', space=vmem, size = 0x2000, scoped, tag = 'input window, operand 2, single buffered']
    #allocation3 [shape = 's32[1]{0}', space=sflag, size = 0x4, scoped, tag = 'scoped memory for group1dcnn_forward.1']
    #allocation4 [shape = 'u8[262144]{0}', space=vmem, size = 0x40000, scoped, tag = 'input window, operand 3, single buffered']
    #allocation5 [shape = 's32[1]{0}', space=sflag, size = 0x4, scoped, tag = 'scoped memory for group1dcnn_forward.1']
    #allocation6 [shape = 'u8[8192]{0}', space=vmem, size = 0x2000, scoped, tag = 'input window, operand 4, single buffered']
    %10 = vsyncpa [#allocation3], 0
    %11 = vsyncpa [#allocation5], 0
    // Predicated region
    $region2: #{group1dcnn_forward.1} parent=1 // pred_check
      _
    $region3: #{group1dcnn_forward.1} parent=1 // pred_check_branch
      %13 = sbr.rel (0) target = $region5
    $region4: #{group1dcnn_forward.1} parent=1 // pred_region
      _
    $region5: #{group1dcnn_forward.1} parent=1 // pred_fallthru
      _
    // Predicated region
    $region6: #{group1dcnn_forward.1} parent=1 // pred_check
      _
    $region7: #{group1dcnn_forward.1} parent=1 // pred_check_branch
      %15 = sbr.rel (0) target = $region9
    $region8: #{group1dcnn_forward.1} parent=1 // pred_region
      _
    $region9: #{group1dcnn_forward.1} parent=1 // pred_fallthru
      _
    // Predicated region
    $region10: #{group1dcnn_forward.1} parent=1 // pred_check
      _
    $region11: #{group1dcnn_forward.1} parent=1 // pred_check_branch
      %17 = sbr.rel (0) target = $region13
    $region12: #{group1dcnn_forward.1} parent=1 // pred_region
      %s19 = ssub.s32 256, 256
      %20 = vsyncadd [#allocation3], %s19
      %s22 = sshll.u32 [#allocation2], 4
      %s23 = int_to_ptr.vmem [resolvable:$true] %s22
      %25 = dma.hbm_to_vmem [thread:$0]  %s2, 256, %s23, [#allocation3]
    $region13: #{group1dcnn_forward.1} parent=1 // pred_fallthru
      _
    // Predicated region
    $region14: #{group1dcnn_forward.1} parent=1 // pred_check
      _
    $region15: #{group1dcnn_forward.1} parent=1 // pred_check_branch
      %27 = sbr.rel (0) target = $region17
    $region16: #{group1dcnn_forward.1} parent=1 // pred_region
      %s29 = ssub.s32 8192, 8192
      %30 = vsyncadd [#allocation5], %s29
      %s31 = sshll.u32 [#allocation4], 4
      %s32 = int_to_ptr.vmem [resolvable:$true] %s31
      %37 = dma.hbm_to_vmem [thread:$0]  %s3, 8192, %s32, [#allocation5], 256, 256, 16
    $region17: #{group1dcnn_forward.1} parent=1 // pred_fallthru
      _
    // Predicated region
    $region18: #{group1dcnn_forward.1} parent=1 // pred_check
      _
    $region19: #{group1dcnn_forward.1} parent=1 // pred_check_branch
      %39 = sbr.rel (0) target = $region21
    $region20: #{group1dcnn_forward.1} parent=1 // pred_region
      %s41 = ssub.s32 256, 256
      %42 = vsyncadd [#allocation5], %s41
      %s44 = sshll.u32 [#allocation6], 4
      %s45 = int_to_ptr.vmem [resolvable:$true] %s44
      %47 = dma.hbm_to_vmem [thread:$0]  %s4, 256, %s45, [#allocation5]
    $region21: #{group1dcnn_forward.1} parent=1 // pred_fallthru
      _
    // Predicated region
    $region22: #{group1dcnn_forward.1} parent=1 // pred_check
      _
    $region23: #{group1dcnn_forward.1} parent=1 // pred_check_branch
      %49 = sbr.rel (0) target = $region25
    $region24: #{group1dcnn_forward.1} parent=1 // pred_region
      %50 = dma.done [#allocation3], 256
    $region25: #{group1dcnn_forward.1} parent=1 // pred_fallthru
      _
    // Predicated region
    $region26: #{group1dcnn_forward.1} parent=1 // pred_check
      _
    $region27: #{group1dcnn_forward.1} parent=1 // pred_check_branch
      %52 = sbr.rel (0) target = $region29
    $region28: #{group1dcnn_forward.1} parent=1 // pred_region
      %53 = dma.done [#allocation5], 8192
    $region29: #{group1dcnn_forward.1} parent=1 // pred_fallthru
      _
    // Predicated region
    $region30: #{group1dcnn_forward.1} parent=1 // pred_check
      _
    $region31: #{group1dcnn_forward.1} parent=1 // pred_check_branch
      %55 = sbr.rel (0) target = $region33
    $region32: #{group1dcnn_forward.1} parent=1 // pred_region
      %56 = dma.done [#allocation5], 256
    $region33: #{group1dcnn_forward.1} parent=1 // pred_fallthru
      _
    %v57 = vld [vmem:[%s0] sm:$0xff]
    %v58 = vld [vmem:[%s1] sm:$0xff]
    %v59 = vld [vmem:[%s1 + $0x8] sm:$0xff]
    %v60 = vld [vmem:[#allocation2] sm:$0xff]
    %v61 = vld [vmem:[#allocation2 + $0x8] sm:$0xff]
    %vm62 = vcmask 64512
    %v64 = vsel %vm62, %v57, 0
    %66 = vmatprep.subr.mxu0 %v59
    %67 = vmatpush1.msra.mxu0 %v58
    %68 = vmatprep.subr.mxu0 0.0
    %69 = vmatpush1.msra.mxu0 0.0
    %70 = vmatprep.subr.mxu0 0.0
    %71 = vmatpush1.msra.mxu0 0.0
    %72 = vmatprep.subr.mxu0 0.0
    %73 = vmatpush1.msra.mxu0 0.0
    %74 = vmatprep.subr.mxu0 0.0
    %75 = vmatpush1.msra.mxu0 0.0
    %76 = vmatprep.subr.mxu0 0.0
    %77 = vmatpush1.msra.mxu0 0.0
    %78 = vmatprep.subr.mxu0 0.0
    %79 = vmatpush1.msra.mxu0 0.0
    %80 = vmatprep.subr.mxu0 0.0
    %81 = vmatpush1.msra.mxu0 0.0
    %82 = vmatprep.subr.mxu0 0.0
    %83 = vmatpush1.msra.mxu0 0.0
    %84 = vmatprep.subr.mxu0 0.0
    %85 = vmatpush1.msra.mxu0 0.0
    %86 = vmatprep.subr.mxu0 0.0
    %87 = vmatpush1.msra.mxu0 0.0
    %88 = vmatprep.subr.mxu0 0.0
    %89 = vmatpush1.msra.mxu0 0.0
    %90 = vmatprep.subr.mxu0 0.0
    %91 = vmatpush1.msra.mxu0 0.0
    %92 = vmatprep.subr.mxu0 0.0
    %93 = vmatpush1.msra.mxu0 0.0
    %94 = vmatprep.subr.mxu0 0.0
    %95 = vmatpush1.msra.mxu0 0.0
    %96 = vmatprep.subr.mxu0 0.0
    %97 = vmatpush1.msra.mxu0 0.0
    %98 = vmatprep.subr.mxu0 0.0
    %99 = vmatpush1.msra.mxu0 0.0
    %100 = vmatprep.subr.mxu0 0.0
    %101 = vmatpush1.msra.mxu0 0.0
    %102 = vmatprep.subr.mxu0 0.0
    %103 = vmatpush1.msra.mxu0 0.0
    %104 = vmatprep.subr.mxu0 0.0
    %105 = vmatpush1.msra.mxu0 0.0
    %106 = vmatprep.subr.mxu0 0.0
    %107 = vmatpush1.msra.mxu0 0.0
    %108 = vmatprep.subr.mxu0 0.0
    %109 = vmatpush1.msra.mxu0 0.0
    %110 = vmatprep.subr.mxu0 0.0
    %111 = vmatpush1.msra.mxu0 0.0
    %112 = vmatprep.subr.mxu0 0.0
    %113 = vmatpush1.msra.mxu0 0.0
    %114 = vmatprep.subr.mxu0 0.0
    %115 = vmatpush1.msra.mxu0 0.0
    %116 = vmatprep.subr.mxu0 0.0
    %117 = vmatpush1.msra.mxu0 0.0
    %118 = vmatprep.subr.mxu0 0.0
    %119 = vmatpush1.msra.mxu0 0.0
    %120 = vmatprep.subr.mxu0 0.0
    %121 = vmatpush1.msra.mxu0 0.0
    %122 = vmatprep.subr.mxu0 0.0
    %123 = vmatpush1.msra.mxu0 0.0
    %124 = vmatprep.subr.mxu0 0.0
    %125 = vmatpush1.msra.mxu0 0.0
    %126 = vmatprep.subr.mxu0 0.0
    %127 = vmatpush1.msra.mxu0 0.0
    %128 = vmatprep.subr.mxu0 0.0
    %129 = vmatpush1.msra.mxu0 0.0
    %130 = vmatprep.mubr.f32.mxu0 0.0
    %131 = vmatmul.mubr.f32.gmra.mrb[0].mxu0 %v64
    %v132 = vpop.f32.mrb[0].mxu0
    %v133 = vadd.f32 %v60, %v132
    %v134 = vpop.f32.mrb[0].mxu0
    %v135 = vadd.f32 %v61, %v134
    %136 = vdwg.mxu0
    %v137 = vmax.f32 %v133, 0.0
    %v138 = vmax.f32 %v135, 0.0
    %v139 = vld [vmem:[#allocation4] sm:$0xff]
    %v140 = vld [vmem:[#allocation4 + $0x8] sm:$0xff]
    %v141 = vld [vmem:[#allocation4 + $0x10] sm:$0xff]
    %v142 = vld [vmem:[#allocation4 + $0x18] sm:$0xff]
    %v143 = vld [vmem:[#allocation4 + $0x20] sm:$0xff]
    %v144 = vld [vmem:[#allocation4 + $0x28] sm:$0xff]
    %v145 = vld [vmem:[#allocation4 + $0x30] sm:$0xff]
    %v146 = vld [vmem:[#allocation4 + $0x38] sm:$0xff]
    %v147 = vld [vmem:[#allocation4 + $0x40] sm:$0xff]
    %v148 = vld [vmem:[#allocation4 + $0x48] sm:$0xff]
    %v149 = vld [vmem:[#allocation4 + $0x50] sm:$0xff]
    %v150 = vld [vmem:[#allocation4 + $0x58] sm:$0xff]
    %v151 = vld [vmem:[#allocation4 + $0x60] sm:$0xff]
    %v152 = vld [vmem:[#allocation4 + $0x68] sm:$0xff]
    %v153 = vld [vmem:[#allocation4 + $0x70] sm:$0xff]
    %v154 = vld [vmem:[#allocation4 + $0x78] sm:$0xff]
    %v155 = vld [vmem:[#allocation4 + $0x80] sm:$0xff]
    %v156 = vld [vmem:[#allocation4 + $0x88] sm:$0xff]
    %v157 = vld [vmem:[#allocation4 + $0x90] sm:$0xff]
    %v158 = vld [vmem:[#allocation4 + $0x98] sm:$0xff]
    %v159 = vld [vmem:[#allocation4 + $0xa0] sm:$0xff]
    %v160 = vld [vmem:[#allocation4 + $0xa8] sm:$0xff]
    %v161 = vld [vmem:[#allocation4 + $0xb0] sm:$0xff]
    %v162 = vld [vmem:[#allocation4 + $0xb8] sm:$0xff]
    %v163 = vld [vmem:[#allocation4 + $0xc0] sm:$0xff]
    %v164 = vld [vmem:[#allocation4 + $0xc8] sm:$0xff]
    %v165 = vld [vmem:[#allocation4 + $0xd0] sm:$0xff]
    %v166 = vld [vmem:[#allocation4 + $0xd8] sm:$0xff]
    %v167 = vld [vmem:[#allocation4 + $0xe0] sm:$0xff]
    %v168 = vld [vmem:[#allocation4 + $0xe8] sm:$0xff]
    %v169 = vld [vmem:[#allocation4 + $0xf0] sm:$0xff]
    %v170 = vld [vmem:[#allocation4 + $0xf8] sm:$0xff]
    %v171 = vld [vmem:[#allocation4 + $0x100] sm:$0xff]
    %v172 = vld [vmem:[#allocation4 + $0x108] sm:$0xff]
    %v173 = vld [vmem:[#allocation4 + $0x110] sm:$0xff]
    %v174 = vld [vmem:[#allocation4 + $0x118] sm:$0xff]
    %v175 = vld [vmem:[#allocation4 + $0x120] sm:$0xff]
    %v176 = vld [vmem:[#allocation4 + $0x128] sm:$0xff]
    %v177 = vld [vmem:[#allocation4 + $0x130] sm:$0xff]
    %v178 = vld [vmem:[#allocation4 + $0x138] sm:$0xff]
    %v179 = vld [vmem:[#allocation4 + $0x140] sm:$0xff]
    %v180 = vld [vmem:[#allocation4 + $0x148] sm:$0xff]
    %v181 = vld [vmem:[#allocation4 + $0x150] sm:$0xff]
    %v182 = vld [vmem:[#allocation4 + $0x158] sm:$0xff]
    %v183 = vld [vmem:[#allocation4 + $0x160] sm:$0xff]
    %v184 = vld [vmem:[#allocation4 + $0x168] sm:$0xff]
    %v185 = vld [vmem:[#allocation4 + $0x170] sm:$0xff]
    %v186 = vld [vmem:[#allocation4 + $0x178] sm:$0xff]
    %v187 = vld [vmem:[#allocation4 + $0x180] sm:$0xff]
    %v188 = vld [vmem:[#allocation4 + $0x188] sm:$0xff]
    %v189 = vld [vmem:[#allocation4 + $0x190] sm:$0xff]
    %v190 = vld [vmem:[#allocation4 + $0x198] sm:$0xff]
    %v191 = vld [vmem:[#allocation4 + $0x1a0] sm:$0xff]
    %v192 = vld [vmem:[#allocation4 + $0x1a8] sm:$0xff]
    %v193 = vld [vmem:[#allocation4 + $0x1b0] sm:$0xff]
    %v194 = vld [vmem:[#allocation4 + $0x1b8] sm:$0xff]
    %v195 = vld [vmem:[#allocation4 + $0x1c0] sm:$0xff]
    %v196 = vld [vmem:[#allocation4 + $0x1c8] sm:$0xff]
    %v197 = vld [vmem:[#allocation4 + $0x1d0] sm:$0xff]
    %v198 = vld [vmem:[#allocation4 + $0x1d8] sm:$0xff]
    %v199 = vld [vmem:[#allocation4 + $0x1e0] sm:$0xff]
    %v200 = vld [vmem:[#allocation4 + $0x1e8] sm:$0xff]
    %v201 = vld [vmem:[#allocation4 + $0x1f0] sm:$0xff]
    %v202 = vld [vmem:[#allocation4 + $0x1f8] sm:$0xff]
    %v203 = vld [vmem:[#allocation6] sm:$0xff]
    %v204 = vld [vmem:[#allocation6 + $0x8] sm:$0xff]
    %205 = vmatprep.subr.mxu0 %v140
    %206 = vmatpush1.msra.mxu0 %v139
    %207 = vmatprep.subr.mxu0 %v142
    %208 = vmatpush1.msra.mxu0 %v141
    %209 = vmatprep.subr.mxu0 %v144
    %210 = vmatpush1.msra.mxu0 %v143
    %211 = vmatprep.subr.mxu0 %v146
    %212 = vmatpush1.msra.mxu0 %v145
    %213 = vmatprep.subr.mxu0 %v148
    %214 = vmatpush1.msra.mxu0 %v147
    %215 = vmatprep.subr.mxu0 %v150
    %216 = vmatpush1.msra.mxu0 %v149
    %217 = vmatprep.subr.mxu0 %v152
    %218 = vmatpush1.msra.mxu0 %v151
    %219 = vmatprep.subr.mxu0 %v154
    %220 = vmatpush1.msra.mxu0 %v153
    %221 = vmatprep.subr.mxu0 %v156
    %222 = vmatpush1.msra.mxu0 %v155
    %223 = vmatprep.subr.mxu0 %v158
    %224 = vmatpush1.msra.mxu0 %v157
    %225 = vmatprep.subr.mxu0 %v160
    %226 = vmatpush1.msra.mxu0 %v159
    %227 = vmatprep.subr.mxu0 %v162
    %228 = vmatpush1.msra.mxu0 %v161
    %229 = vmatprep.subr.mxu0 %v164
    %230 = vmatpush1.msra.mxu0 %v163
    %231 = vmatprep.subr.mxu0 %v166
    %232 = vmatpush1.msra.mxu0 %v165
    %233 = vmatprep.subr.mxu0 %v168
    %234 = vmatpush1.msra.mxu0 %v167
    %235 = vmatprep.subr.mxu0 %v170
    %236 = vmatpush1.msra.mxu0 %v169
    %237 = vmatprep.subr.mxu0 %v172
    %238 = vmatpush1.msra.mxu0 %v171
    %239 = vmatprep.subr.mxu0 %v174
    %240 = vmatpush1.msra.mxu0 %v173
    %241 = vmatprep.subr.mxu0 %v176
    %242 = vmatpush1.msra.mxu0 %v175
    %243 = vmatprep.subr.mxu0 %v178
    %244 = vmatpush1.msra.mxu0 %v177
    %245 = vmatprep.subr.mxu0 %v180
    %246 = vmatpush1.msra.mxu0 %v179
    %247 = vmatprep.subr.mxu0 %v182
    %248 = vmatpush1.msra.mxu0 %v181
    %249 = vmatprep.subr.mxu0 %v184
    %250 = vmatpush1.msra.mxu0 %v183
    %251 = vmatprep.subr.mxu0 %v186
    %252 = vmatpush1.msra.mxu0 %v185
    %253 = vmatprep.subr.mxu0 %v188
    %254 = vmatpush1.msra.mxu0 %v187
    %255 = vmatprep.subr.mxu0 %v190
    %256 = vmatpush1.msra.mxu0 %v189
    %257 = vmatprep.subr.mxu0 %v192
    %258 = vmatpush1.msra.mxu0 %v191
    %259 = vmatprep.subr.mxu0 %v194
    %260 = vmatpush1.msra.mxu0 %v193
    %261 = vmatprep.subr.mxu0 %v196
    %262 = vmatpush1.msra.mxu0 %v195
    %263 = vmatprep.subr.mxu0 %v198
    %264 = vmatpush1.msra.mxu0 %v197
    %265 = vmatprep.subr.mxu0 %v200
    %266 = vmatpush1.msra.mxu0 %v199
    %267 = vmatprep.subr.mxu0 %v202
    %268 = vmatpush1.msra.mxu0 %v201
    %269 = vmatprep.mubr.f32.mxu0 %v138
    %270 = vmatmul.mubr.f32.gmra.mrb[0].mxu0 %v137
    %v271 = vpop.f32.mrb[0].mxu0
    %v272 = vadd.f32 %v203, %v271
    %v273 = vpop.f32.mrb[0].mxu0
    %v274 = vadd.f32 %v204, %v273
    %275 = vdwg.mxu0
    %v276 = vmax.f32 %v272, 0.0
    %v277 = vmax.f32 %v274, 0.0
    %278 = vst [vmem:[%s5] sm:$0xff] %v276
    %279 = vst [vmem:[%s5 + $0x8] sm:$0xff] %v277
    // Predicated region
    $region34: #{group1dcnn_forward.1} parent=1 // pred_check
      _
    $region35: #{group1dcnn_forward.1} parent=1 // pred_check_branch
      %281 = sbr.rel (0) target = $region37
    $region36: #{group1dcnn_forward.1} parent=1 // pred_region
      _
    $region37: #{group1dcnn_forward.1} parent=1 // pred_fallthru
      _
    // Predicated region
    $region38: #{group1dcnn_forward.1} parent=1 // pred_check
      _
    $region39: #{group1dcnn_forward.1} parent=1 // pred_check_branch
      %283 = sbr.rel (0) target = $region41
    $region40: #{group1dcnn_forward.1} parent=1 // pred_region
      _
    $region41: #{group1dcnn_forward.1} parent=1 // pred_fallthru
      _
    %284 = vsyncpa [#allocation3], 1
    %285 = vsyncpa [#allocation5], 1

</llo_original>
